<compile_context>
chip_gen: v7x
topology: tpu7x:2x2x1
jax: 0.10.0
libtpu: 0.0.40
codegen_flags: <defaults>
</compile_context>

<pallas_src>
import math
import functools

import jax
import jax.numpy as jnp
from jax import lax
from jax.experimental import pallas as pl
from jax.experimental.pallas import tpu as pltpu


# ---------------------------------------------------------------------------
# helpers
# ---------------------------------------------------------------------------
def _round_up(x, m):
    return ((x + m - 1) // m) * m


def _pick_row_tile(total, target):
    """Largest multiple-of-8 tile <= target that divides `total` (else total)."""
    if total <= target:
        return total
    t = (target // 8) * 8
    while t > 8 and total % t != 0:
        t -= 8
    return t if total % t == 0 else total


def _pick_in_tile(in_dim, target):
    """Contraction tile: a multiple of 128 that divides in_dim, else whole dim."""
    if in_dim <= target:
        return in_dim
    t = (target // 128) * 128
    while t >= 128 and in_dim % t != 0:
        t -= 128
    return t if (t >= 128 and in_dim % t == 0) else in_dim


# ---------------------------------------------------------------------------
# Kernel 1: fused, K-tiled Q/K/V projection with head-major outputs.
#   x:(1, tm, tIn) @ W:(tIn, 3*H*D) accumulated in f32 over the In axis;
#   at the last K step add bias and store q/k/v as (1, H, tm, D) bf16 blocks.
# ---------------------------------------------------------------------------
def _qkv_proj_kernel(x_ref, w_ref, b_ref, q_ref, k_ref, v_ref, acc_ref, *,
                     num_heads, head_dim):
    kidx = pl.program_id(2)

    @pl.when(kidx == 0)
    def _():
        acc_ref[...] = jnp.zeros_like(acc_ref)

    acc_ref[...] += jnp.dot(x_ref[0], w_ref[...],
                            preferred_element_type=jnp.float32)

    @pl.when(kidx == pl.num_programs(2) - 1)
    def _():
        hd = num_heads * head_dim
        z = acc_ref[...] + b_ref[...]                    # (tm, 3*H*D) f32
        # Head split happens once here (not per KV step in attention).
        for h in range(num_heads):
            lo, hi = h * head_dim, (h + 1) * head_dim
            q_ref[0, h] = z[:, lo:hi].astype(q_ref.dtype)
            k_ref[0, h] = z[:, hd + lo:hd + hi].astype(k_ref.dtype)
            v_ref[0, h] = z[:, 2 * hd + lo:2 * hd + hi].astype(v_ref.dtype)


def qkv_projection(x, w_qkv, b_qkv, num_heads, head_dim, *,
                   row_tile=512, in_tile=512):
    bsz, s_pad, in_dim = x.shape
    hd = num_heads * head_dim

    tm = _pick_row_tile(s_pad, row_tile)
    t_in = _pick_in_tile(in_dim, in_tile)
    grid = (bsz, s_pad // tm, in_dim // t_in)

    out_sd = jax.ShapeDtypeStruct((bsz, num_heads, s_pad, head_dim),
                                  jnp.bfloat16)
    qkv_spec = pl.BlockSpec((1, num_heads, tm, head_dim),
                            lambda b, i, kidx: (b, 0, i, 0))
    kernel = functools.partial(_qkv_proj_kernel,
                               num_heads=num_heads, head_dim=head_dim)
    return pl.pallas_call(
        kernel,
        grid=grid,
        in_specs=[
            pl.BlockSpec((1, tm, t_in), lambda b, i, kidx: (b, i, kidx)),
            pl.BlockSpec((t_in, 3 * hd), lambda b, i, kidx: (kidx, 0)),
            pl.BlockSpec((1, 3 * hd), lambda b, i, kidx: (0, 0)),
        ],
        out_specs=[qkv_spec, qkv_spec, qkv_spec],
        out_shape=(out_sd, out_sd, out_sd),
        scratch_shapes=[pltpu.VMEM((tm, 3 * hd), jnp.float32)],
        compiler_params=pltpu.CompilerParams(
            dimension_semantics=("parallel", "parallel", "arbitrary")),
    )(x, w_qkv, b_qkv)


# ---------------------------------------------------------------------------
# Kernel 2: flash-style attention over head-major (B, H, S, D) bf16 Q/K/V.
#   grid = (B, S/tq, S/tk); KV axis is the reduction ("arbitrary").
#   Online softmax state (m, l, acc) in f32 VMEM scratch; output written
#   lane-dense as one (tq, H*D) block in the epilogue.
# ---------------------------------------------------------------------------
def _flash_attn_kernel(q_ref, k_ref, v_ref, o_ref, m_sc, l_sc, acc_sc, *,
                       num_heads, kv_tile, kv_valid, mask_kv):
    ki = pl.program_id(2)

    @pl.when(ki == 0)
    def _():
        m_sc[...] = jnp.full_like(m_sc, -jnp.inf)
        l_sc[...] = jnp.zeros_like(l_sc)
        acc_sc[...] = jnp.zeros_like(acc_sc)

    q = q_ref[0]                      # (H, tq, D) bf16, 1/sqrt(D) already folded
    k = k_ref[0]                      # (H, tk, D) bf16
    v = v_ref[0]                      # (H, tk, D) bf16

    # One batched-over-heads matmul per KV tile (no per-head lane slicing).
    s = jnp.einsum("hqd,hkd->hqk", q, k,
                   preferred_element_type=jnp.float32)       # (H, tq, tk) f32

    if mask_kv:
        # Mask padded KV columns (only the last KV tile can be ragged).
        col = ki * kv_tile + lax.broadcasted_iota(jnp.int32, (1, 1, kv_tile), 2)
        s = jnp.where(col < kv_valid, s, -jnp.inf)

    m_prev = m_sc[...]
    m_new = jnp.maximum(m_prev, jnp.max(s, axis=-1, keepdims=True))
    alpha = jnp.exp(m_prev - m_new)
    p = jnp.exp(s - m_new)
    l_sc[...] = alpha * l_sc[...] + jnp.sum(p, axis=-1, keepdims=True)
    acc_sc[...] = alpha * acc_sc[...] + jnp.einsum(
        "hqk,hkd->hqd", p.astype(v.dtype), v,
        preferred_element_type=jnp.float32)
    m_sc[...] = m_new

    @pl.when(ki == pl.num_programs(2) - 1)
    def _():
        ctx = acc_sc[...] / l_sc[...]                         # exact normalize
        # Assemble the full (tq, H*D) context and do ONE lane-dense store.
        ctx_full = jnp.concatenate(
            [ctx[h] for h in range(num_heads)], axis=-1)
        o_ref[0] = ctx_full.astype(o_ref.dtype)


def flash_attention(q, k, v, num_heads, head_dim, *, q_tile, kv_tile, kv_valid):
    bsz, _, s_pad, _ = q.shape
    hd = num_heads * head_dim
    grid = (bsz, s_pad // q_tile, s_pad // kv_tile)

    kernel = functools.partial(
        _flash_attn_kernel, num_heads=num_heads, kv_tile=kv_tile,
        kv_valid=kv_valid, mask_kv=(s_pad != kv_valid))

    q_spec = pl.BlockSpec((1, num_heads, q_tile, head_dim),
                          lambda b, qi, ki: (b, 0, qi, 0))
    # TODO(synk): if profiling shows exposed K/V DMA at this tile, deepen the
    # pipeline with pipeline_mode=pl.Buffered(3) on the K/V specs.
    kv_spec = pl.BlockSpec((1, num_heads, kv_tile, head_dim),
                           lambda b, qi, ki: (b, 0, ki, 0))

    return pl.pallas_call(
        kernel,
        grid=grid,
        in_specs=[q_spec, kv_spec, kv_spec],
        out_specs=pl.BlockSpec((1, q_tile, hd), lambda b, qi, ki: (b, qi, 0)),
        out_shape=jax.ShapeDtypeStruct((bsz, s_pad, hd), jnp.float32),
        scratch_shapes=[
            pltpu.VMEM((num_heads, q_tile, 1), jnp.float32),          # m
            pltpu.VMEM((num_heads, q_tile, 1), jnp.float32),          # l
            pltpu.VMEM((num_heads, q_tile, head_dim), jnp.float32),   # acc
        ],
        compiler_params=pltpu.CompilerParams(
            dimension_semantics=("parallel", "parallel", "arbitrary")),
    )(q, k, v)


# ---------------------------------------------------------------------------
# Forward wrapper (pads S to a tile multiple; padded KV masked in-kernel)
# ---------------------------------------------------------------------------
def self_attention_forward(x, w_qkv, b_qkv, num_heads, head_dim, *,
                           q_tile=256, kv_tile=256, row_tile=512, in_tile=512):
    bsz, seq, _ = x.shape

    tq = min(q_tile, _round_up(seq, 8))
    s_pad = _round_up(seq, tq)
    tk = kv_tile if s_pad % kv_tile == 0 else tq

    if s_pad != seq:
        x = jnp.pad(x, ((0, 0), (0, s_pad - seq), (0, 0)))

    q, k, v = qkv_projection(x.astype(jnp.bfloat16), w_qkv, b_qkv,
                             num_heads, head_dim,
                             row_tile=row_tile, in_tile=in_tile)

    ctx = flash_attention(q, k, v, num_heads, head_dim,
                          q_tile=tq, kv_tile=tk, kv_valid=seq)
    return ctx[:, :seq, :]


# ---------------------------------------------------------------------------
# Module wrapper
# ---------------------------------------------------------------------------
class SelfAttentionPallas:
    def __init__(self, num_attention_heads, input_size, hidden_size, key):
        self.num_attention_heads = num_attention_heads
        self.attention_head_size = hidden_size // num_attention_heads
        self.all_head_size = self.num_attention_heads * self.attention_head_size

        bound = 1.0 / math.sqrt(input_size)
        keys = jax.random.split(key, 6)

        def uni(k, shape):
            return jax.random.uniform(k, shape, jnp.float32, -bound, bound)

        wq = uni(keys[0], (input_size, self.all_head_size))
        bq = uni(keys[1], (self.all_head_size,))
        wk = uni(keys[2], (input_size, self.all_head_size))
        bk = uni(keys[3], (self.all_head_size,))
        wv = uni(keys[4], (input_size, self.all_head_size))
        bv = uni(keys[5], (self.all_head_size,))

        # Fold 1/sqrt(head_dim) into the Q projection so no per-KV-step scale
        # multiply survives in the attention hot loop.
        scale = 1.0 / math.sqrt(self.attention_head_size)
        w_fused = jnp.concatenate([wq * scale, wk, wv], axis=1)    # (In, 3*HD)
        b_fused = jnp.concatenate([bq * scale, bk, bv])[None, :]   # (1, 3*HD)

        self.w_qkv = w_fused.astype(jnp.bfloat16)   # bf16 MXU inputs
        self.b_qkv = b_fused.astype(jnp.float32)    # bias added in f32

    def __call__(self, x):
        return self_attention_forward(
            x, self.w_qkv, self.b_qkv,
            self.num_attention_heads, self.attention_head_size)


# ---------------------------------------------------------------------------
# Pure-JAX reference mirroring the PyTorch math (and the kernel's bf16 casts)
# ---------------------------------------------------------------------------
def _reference(module, x):
    bsz, seq, _ = x.shape
    h, d = module.num_attention_heads, module.attention_head_size
    hd = module.all_head_size

    w = module.w_qkv.astype(jnp.float32)        # Wq already carries 1/sqrt(d)
    b = module.b_qkv
    xb = x.astype(jnp.bfloat16).astype(jnp.float32)
    z = xb @ w + b
    q, k, v = z[..., :hd], z[..., hd:2 * hd], z[..., 2 * hd:]

    def heads(t):
        t = t.astype(jnp.bfloat16).astype(jnp.float32)
        return t.reshape(bsz, seq, h, d).transpose(0, 2, 1, 3)

    q, k, v = heads(q), heads(k), heads(v)
    scores = jnp.einsum("bhqd,bhkd->bhqk", q, k)       # scale folded into Wq
    probs = jax.nn.softmax(scores, axis=-1)
    probs = probs.astype(jnp.bfloat16).astype(jnp.float32)
    ctx = jnp.einsum("bhqk,bhkd->bhqd", probs, v)
    return ctx.transpose(0, 2, 1, 3).reshape(bsz, seq, hd)


if __name__ == "__main__":
    key = jax.random.PRNGKey(0)
    k_param, k_x = jax.random.split(key)

    B, S, INPUT_SIZE, HIDDEN_SIZE, HEADS = 2, 8, 16, 32, 4

    module = SelfAttentionPallas(HEADS, INPUT_SIZE, HIDDEN_SIZE, k_param)
    x = jax.random.normal(k_x, (B, S, INPUT_SIZE), jnp.float32)

    out = module(x)
    out = jax.block_until_ready(out)

    ref = _reference(module, x)
    assert out.shape == (B, S, HIDDEN_SIZE), out.shape
    # bf16 MXU inputs -> compare against a reference using the same casts.
    assert jnp.allclose(out, ref, atol=1e-2, rtol=1e-2), "mismatch vs reference"

    print("KERNEL_OK")
</pallas_src>

<mosaic_0001>
module attributes {stable_mosaic.version = 11 : i64} {
  func.func @_qkv_proj_kernel(%arg0: i32, %arg1: i32, %arg2: i32, %arg3: memref<1x8x16xbf16, #tpu.memory_space<vmem>>, %arg4: memref<16x96xbf16, #tpu.memory_space<vmem>>, %arg5: memref<1x96xf32, #tpu.memory_space<vmem>>, %arg6: memref<1x4x8x8xbf16, #tpu.memory_space<vmem>>, %arg7: memref<1x4x8x8xbf16, #tpu.memory_space<vmem>>, %arg8: memref<1x4x8x8xbf16, #tpu.memory_space<vmem>>, %arg9: memref<8x96xf32, #tpu.memory_space<vmem>>) attributes {dimension_semantics = [#tpu.dimension_semantics<parallel>, #tpu.dimension_semantics<parallel>, #tpu.dimension_semantics<arbitrary>], iteration_bounds = array<i64: 2, 1, 1>, scalar_prefetch = 0 : i64, scratch_operands = 1 : i64, tpu.core_type = #tpu.core_type<tc>, window_params = [{transform_indices = @transform_0, window_bounds = array<i64: 1, 8, 16>}, {transform_indices = @transform_1, window_bounds = array<i64: 16, 96>}, {pipeline_mode = #tpu.pipeline_mode<synchronous>, transform_indices = @transform_2, window_bounds = array<i64: 1, 96>}, {transform_indices = @transform_3, window_bounds = array<i64: 1, 4, 8, 8>}, {transform_indices = @transform_4, window_bounds = array<i64: 1, 4, 8, 8>}, {transform_indices = @transform_5, window_bounds = array<i64: 1, 4, 8, 8>}]} {
    %c0_i32 = arith.constant 0 : i32
    %0 = arith.cmpi eq, %arg2, %c0_i32 : i32
    %1 = arith.extui %0 : i1 to i32
    %c0_i32_0 = arith.constant 0 : i32
    %2 = arith.cmpi ne, %1, %c0_i32_0 : i32
    scf.if %2 {
      %cst_11 = arith.constant 0.000000e+00 : f32
      %13 = vector.broadcast %cst_11 : f32 to vector<8x96xf32>
      %c0_12 = arith.constant 0 : index
      %c0_13 = arith.constant 0 : index
      %14 = vector.load %arg9[%c0_12, %c0_13] : memref<8x96xf32, #tpu.memory_space<vmem>>, vector<8x96xf32>
      tpu.vector_store %arg9[%c0_12, %c0_13], %13 {strides = array<i32>} : memref<8x96xf32, #tpu.memory_space<vmem>>, vector<8x96xf32>,
    } else {
    }
    %c0 = arith.constant 0 : index
    %c0_1 = arith.constant 0 : index
    %3 = vector.load %arg9[%c0, %c0_1] : memref<8x96xf32, #tpu.memory_space<vmem>>, vector<8x96xf32>
    %c0_2 = arith.constant 0 : index
    %c0_3 = arith.constant 0 : index
    %c0_4 = arith.constant 0 : index
    %4 = vector.load %arg3[%c0_2, %c0_3, %c0_4] : memref<1x8x16xbf16, #tpu.memory_space<vmem>>, vector<1x8x16xbf16>
    %5 = vector.shape_cast %4 : vector<1x8x16xbf16> to vector<8x16xbf16>
    %c0_5 = arith.constant 0 : index
    %c0_6 = arith.constant 0 : index
    %6 = vector.load %arg4[%c0_5, %c0_6] : memref<16x96xbf16, #tpu.memory_space<vmem>>, vector<16x96xbf16>
    %cst = arith.constant dense<0.000000e+00> : vector<8x96xf32>
    %7 = tpu.matmul %5, %6, %cst {dimension_numbers = #tpu.dot_dimension_numbers<[1], [0], [0], [1], [0, 0, 1, 1], [], []>} : vector<8x16xbf16>, vector<16x96xbf16>, vector<8x96xf32> -> vector<8x96xf32>
    %8 = arith.addf %3, %7 : vector<8x96xf32>
    %c0_7 = arith.constant 0 : index
    %c0_8 = arith.constant 0 : index
    %9 = vector.load %arg9[%c0_7, %c0_8] : memref<8x96xf32, #tpu.memory_space<vmem>>, vector<8x96xf32>
    tpu.vector_store %arg9[%c0_7, %c0_8], %8 {strides = array<i32>} : memref<8x96xf32, #tpu.memory_space<vmem>>, vector<8x96xf32>,
    %c0_i32_9 = arith.constant 0 : i32
    %10 = arith.cmpi eq, %arg2, %c0_i32_9 : i32
    %11 = arith.extui %10 : i1 to i32
    %c0_i32_10 = arith.constant 0 : i32
    %12 = arith.cmpi ne, %11, %c0_i32_10 : i32
    scf.if %12 {
      %c0_11 = arith.constant 0 : index
      %c0_12 = arith.constant 0 : index
      %13 = vector.load %arg9[%c0_11, %c0_12] : memref<8x96xf32, #tpu.memory_space<vmem>>, vector<8x96xf32>
      %c0_13 = arith.constant 0 : index
      %c0_14 = arith.constant 0 : index
      %14 = vector.load %arg5[%c0_13, %c0_14] : memref<1x96xf32, #tpu.memory_space<vmem>>, vector<1x96xf32>
      %15 = vector.broadcast %14 : vector<1x96xf32> to vector<8x96xf32>
      %16 = arith.addf %13, %15 : vector<8x96xf32>
      %17 = vector.extract_strided_slice %16 {offsets = [0, 0], sizes = [8, 8], strides = [1, 1]} : vector<8x96xf32> to vector<8x8xf32>
      %18 = arith.truncf %17 : vector<8x8xf32> to vector<8x8xbf16>
      %c0_15 = arith.constant 0 : index
      %c0_16 = arith.constant 0 : index
      %c0_17 = arith.constant 0 : index
      %c0_18 = arith.constant 0 : index
      %19 = vector.load %arg6[%c0_15, %c0_16, %c0_17, %c0_18] : memref<1x4x8x8xbf16, #tpu.memory_space<vmem>>, vector<1x1x8x8xbf16>
      %20 = vector.shape_cast %19 : vector<1x1x8x8xbf16> to vector<8x8xbf16>
      %21 = vector.shape_cast %18 : vector<8x8xbf16> to vector<1x1x8x8xbf16>
      tpu.vector_store %arg6[%c0_15, %c0_16, %c0_17, %c0_18], %21 {strides = array<i32>} : memref<1x4x8x8xbf16, #tpu.memory_space<vmem>>, vector<1x1x8x8xbf16>,
      %22 = vector.extract_strided_slice %16 {offsets = [0, 32], sizes = [8, 8], strides = [1, 1]} : vector<8x96xf32> to vector<8x8xf32>
      %23 = arith.truncf %22 : vector<8x8xf32> to vector<8x8xbf16>
      %c0_19 = arith.constant 0 : index
      %c0_20 = arith.constant 0 : index
      %c0_21 = arith.constant 0 : index
      %c0_22 = arith.constant 0 : index
      %24 = vector.load %arg7[%c0_19, %c0_20, %c0_21, %c0_22] : memref<1x4x8x8xbf16, #tpu.memory_space<vmem>>, vector<1x1x8x8xbf16>
      %25 = vector.shape_cast %24 : vector<1x1x8x8xbf16> to vector<8x8xbf16>
      %26 = vector.shape_cast %23 : vector<8x8xbf16> to vector<1x1x8x8xbf16>
      tpu.vector_store %arg7[%c0_19, %c0_20, %c0_21, %c0_22], %26 {strides = array<i32>} : memref<1x4x8x8xbf16, #tpu.memory_space<vmem>>, vector<1x1x8x8xbf16>,
      %27 = vector.extract_strided_slice %16 {offsets = [0, 64], sizes = [8, 8], strides = [1, 1]} : vector<8x96xf32> to vector<8x8xf32>
      %28 = arith.truncf %27 : vector<8x8xf32> to vector<8x8xbf16>
      %c0_23 = arith.constant 0 : index
      %c0_24 = arith.constant 0 : index
      %c0_25 = arith.constant 0 : index
      %c0_26 = arith.constant 0 : index
      %29 = vector.load %arg8[%c0_23, %c0_24, %c0_25, %c0_26] : memref<1x4x8x8xbf16, #tpu.memory_space<vmem>>, vector<1x1x8x8xbf16>
      %30 = vector.shape_cast %29 : vector<1x1x8x8xbf16> to vector<8x8xbf16>
      %31 = vector.shape_cast %28 : vector<8x8xbf16> to vector<1x1x8x8xbf16>
      tpu.vector_store %arg8[%c0_23, %c0_24, %c0_25, %c0_26], %31 {strides = array<i32>} : memref<1x4x8x8xbf16, #tpu.memory_space<vmem>>, vector<1x1x8x8xbf16>,
      %32 = vector.extract_strided_slice %16 {offsets = [0, 8], sizes = [8, 8], strides = [1, 1]} : vector<8x96xf32> to vector<8x8xf32>
      %33 = arith.truncf %32 : vector<8x8xf32> to vector<8x8xbf16>
      %c0_27 = arith.constant 0 : index
      %c1 = arith.constant 1 : index
      %c0_28 = arith.constant 0 : index
      %c0_29 = arith.constant 0 : index
      %34 = vector.load %arg6[%c0_27, %c1, %c0_28, %c0_29] : memref<1x4x8x8xbf16, #tpu.memory_space<vmem>>, vector<1x1x8x8xbf16>
      %35 = vector.shape_cast %34 : vector<1x1x8x8xbf16> to vector<8x8xbf16>
      %36 = vector.shape_cast %33 : vector<8x8xbf16> to vector<1x1x8x8xbf16>
      tpu.vector_store %arg6[%c0_27, %c1, %c0_28, %c0_29], %36 {strides = array<i32>} : memref<1x4x8x8xbf16, #tpu.memory_space<vmem>>, vector<1x1x8x8xbf16>,
      %37 = vector.extract_strided_slice %16 {offsets = [0, 40], sizes = [8, 8], strides = [1, 1]} : vector<8x96xf32> to vector<8x8xf32>
      %38 = arith.truncf %37 : vector<8x8xf32> to vector<8x8xbf16>
      %c0_30 = arith.constant 0 : index
      %c1_31 = arith.constant 1 : index
      %c0_32 = arith.constant 0 : index
      %c0_33 = arith.constant 0 : index
      %39 = vector.load %arg7[%c0_30, %c1_31, %c0_32, %c0_33] : memref<1x4x8x8xbf16, #tpu.memory_space<vmem>>, vector<1x1x8x8xbf16>
      %40 = vector.shape_cast %39 : vector<1x1x8x8xbf16> to vector<8x8xbf16>
      %41 = vector.shape_cast %38 : vector<8x8xbf16> to vector<1x1x8x8xbf16>
      tpu.vector_store %arg7[%c0_30, %c1_31, %c0_32, %c0_33], %41 {strides = array<i32>} : memref<1x4x8x8xbf16, #tpu.memory_space<vmem>>, vector<1x1x8x8xbf16>,
      %42 = vector.extract_strided_slice %16 {offsets = [0, 72], sizes = [8, 8], strides = [1, 1]} : vector<8x96xf32> to vector<8x8xf32>
      %43 = arith.truncf %42 : vector<8x8xf32> to vector<8x8xbf16>
      %c0_34 = arith.constant 0 : index
      %c1_35 = arith.constant 1 : index
      %c0_36 = arith.constant 0 : index
      %c0_37 = arith.constant 0 : index
      %44 = vector.load %arg8[%c0_34, %c1_35, %c0_36, %c0_37] : memref<1x4x8x8xbf16, #tpu.memory_space<vmem>>, vector<1x1x8x8xbf16>
      %45 = vector.shape_cast %44 : vector<1x1x8x8xbf16> to vector<8x8xbf16>
      %46 = vector.shape_cast %43 : vector<8x8xbf16> to vector<1x1x8x8xbf16>
      tpu.vector_store %arg8[%c0_34, %c1_35, %c0_36, %c0_37], %46 {strides = array<i32>} : memref<1x4x8x8xbf16, #tpu.memory_space<vmem>>, vector<1x1x8x8xbf16>,
      %47 = vector.extract_strided_slice %16 {offsets = [0, 16], sizes = [8, 8], strides = [1, 1]} : vector<8x96xf32> to vector<8x8xf32>
      %48 = arith.truncf %47 : vector<8x8xf32> to vector<8x8xbf16>
      %c0_38 = arith.constant 0 : index
      %c2 = arith.constant 2 : index
      %c0_39 = arith.constant 0 : index
      %c0_40 = arith.constant 0 : index
      %49 = vector.load %arg6[%c0_38, %c2, %c0_39, %c0_40] : memref<1x4x8x8xbf16, #tpu.memory_space<vmem>>, vector<1x1x8x8xbf16>
      %50 = vector.shape_cast %49 : vector<1x1x8x8xbf16> to vector<8x8xbf16>
      %51 = vector.shape_cast %48 : vector<8x8xbf16> to vector<1x1x8x8xbf16>
      tpu.vector_store %arg6[%c0_38, %c2, %c0_39, %c0_40], %51 {strides = array<i32>} : memref<1x4x8x8xbf16, #tpu.memory_space<vmem>>, vector<1x1x8x8xbf16>,
      %52 = vector.extract_strided_slice %16 {offsets = [0, 48], sizes = [8, 8], strides = [1, 1]} : vector<8x96xf32> to vector<8x8xf32>
      %53 = arith.truncf %52 : vector<8x8xf32> to vector<8x8xbf16>
      %c0_41 = arith.constant 0 : index
      %c2_42 = arith.constant 2 : index
      %c0_43 = arith.constant 0 : index
      %c0_44 = arith.constant 0 : index
      %54 = vector.load %arg7[%c0_41, %c2_42, %c0_43, %c0_44] : memref<1x4x8x8xbf16, #tpu.memory_space<vmem>>, vector<1x1x8x8xbf16>
      %55 = vector.shape_cast %54 : vector<1x1x8x8xbf16> to vector<8x8xbf16>
      %56 = vector.shape_cast %53 : vector<8x8xbf16> to vector<1x1x8x8xbf16>
      tpu.vector_store %arg7[%c0_41, %c2_42, %c0_43, %c0_44], %56 {strides = array<i32>} : memref<1x4x8x8xbf16, #tpu.memory_space<vmem>>, vector<1x1x8x8xbf16>,
      %57 = vector.extract_strided_slice %16 {offsets = [0, 80], sizes = [8, 8], strides = [1, 1]} : vector<8x96xf32> to vector<8x8xf32>
      %58 = arith.truncf %57 : vector<8x8xf32> to vector<8x8xbf16>
      %c0_45 = arith.constant 0 : index
      %c2_46 = arith.constant 2 : index
      %c0_47 = arith.constant 0 : index
      %c0_48 = arith.constant 0 : index
      %59 = vector.load %arg8[%c0_45, %c2_46, %c0_47, %c0_48] : memref<1x4x8x8xbf16, #tpu.memory_space<vmem>>, vector<1x1x8x8xbf16>
      %60 = vector.shape_cast %59 : vector<1x1x8x8xbf16> to vector<8x8xbf16>
      %61 = vector.shape_cast %58 : vector<8x8xbf16> to vector<1x1x8x8xbf16>
      tpu.vector_store %arg8[%c0_45, %c2_46, %c0_47, %c0_48], %61 {strides = array<i32>} : memref<1x4x8x8xbf16, #tpu.memory_space<vmem>>, vector<1x1x8x8xbf16>,
      %62 = vector.extract_strided_slice %16 {offsets = [0, 24], sizes = [8, 8], strides = [1, 1]} : vector<8x96xf32> to vector<8x8xf32>
      %63 = arith.truncf %62 : vector<8x8xf32> to vector<8x8xbf16>
      %c0_49 = arith.constant 0 : index
      %c3 = arith.constant 3 : index
      %c0_50 = arith.constant 0 : index
      %c0_51 = arith.constant 0 : index
      %64 = vector.load %arg6[%c0_49, %c3, %c0_50, %c0_51] : memref<1x4x8x8xbf16, #tpu.memory_space<vmem>>, vector<1x1x8x8xbf16>
      %65 = vector.shape_cast %64 : vector<1x1x8x8xbf16> to vector<8x8xbf16>
      %66 = vector.shape_cast %63 : vector<8x8xbf16> to vector<1x1x8x8xbf16>
      tpu.vector_store %arg6[%c0_49, %c3, %c0_50, %c0_51], %66 {strides = array<i32>} : memref<1x4x8x8xbf16, #tpu.memory_space<vmem>>, vector<1x1x8x8xbf16>,
      %67 = vector.extract_strided_slice %16 {offsets = [0, 56], sizes = [8, 8], strides = [1, 1]} : vector<8x96xf32> to vector<8x8xf32>
      %68 = arith.truncf %67 : vector<8x8xf32> to vector<8x8xbf16>
      %c0_52 = arith.constant 0 : index
      %c3_53 = arith.constant 3 : index
      %c0_54 = arith.constant 0 : index
      %c0_55 = arith.constant 0 : index
      %69 = vector.load %arg7[%c0_52, %c3_53, %c0_54, %c0_55] : memref<1x4x8x8xbf16, #tpu.memory_space<vmem>>, vector<1x1x8x8xbf16>
      %70 = vector.shape_cast %69 : vector<1x1x8x8xbf16> to vector<8x8xbf16>
      %71 = vector.shape_cast %68 : vector<8x8xbf16> to vector<1x1x8x8xbf16>
      tpu.vector_store %arg7[%c0_52, %c3_53, %c0_54, %c0_55], %71 {strides = array<i32>} : memref<1x4x8x8xbf16, #tpu.memory_space<vmem>>, vector<1x1x8x8xbf16>,
      %72 = vector.extract_strided_slice %16 {offsets = [0, 88], sizes = [8, 8], strides = [1, 1]} : vector<8x96xf32> to vector<8x8xf32>
      %73 = arith.truncf %72 : vector<8x8xf32> to vector<8x8xbf16>
      %c0_56 = arith.constant 0 : index
      %c3_57 = arith.constant 3 : index
      %c0_58 = arith.constant 0 : index
      %c0_59 = arith.constant 0 : index
      %74 = vector.load %arg8[%c0_56, %c3_57, %c0_58, %c0_59] : memref<1x4x8x8xbf16, #tpu.memory_space<vmem>>, vector<1x1x8x8xbf16>
      %75 = vector.shape_cast %74 : vector<1x1x8x8xbf16> to vector<8x8xbf16>
      %76 = vector.shape_cast %73 : vector<8x8xbf16> to vector<1x1x8x8xbf16>
      tpu.vector_store %arg8[%c0_56, %c3_57, %c0_58, %c0_59], %76 {strides = array<i32>} : memref<1x4x8x8xbf16, #tpu.memory_space<vmem>>, vector<1x1x8x8xbf16>,
    } else {
    }
    return
  }
  func.func @transform_0(%arg0: i32, %arg1: i32, %arg2: i32) -> (i32, i32, i32) {
    %c0_i32 = arith.constant 0 : i32
    return %arg0, %arg1, %arg2 : i32, i32, i32
  }
  func.func @transform_1(%arg0: i32, %arg1: i32, %arg2: i32) -> (i32, i32) {
    %c0_i32 = arith.constant 0 : i32
    %c0_i32_0 = arith.constant 0 : i32
    return %arg2, %c0_i32 : i32, i32
  }
  func.func @transform_2(%arg0: i32, %arg1: i32, %arg2: i32) -> (i32, i32) {
    %c0_i32 = arith.constant 0 : i32
    %c0_i32_0 = arith.constant 0 : i32
    %c0_i32_1 = arith.constant 0 : i32
    return %c0_i32, %c0_i32_0 : i32, i32
  }
  func.func @transform_3(%arg0: i32, %arg1: i32, %arg2: i32) -> (i32, i32, i32, i32) {
    %c0_i32 = arith.constant 0 : i32
    %c0_i32_0 = arith.constant 0 : i32
    %c0_i32_1 = arith.constant 0 : i32
    return %arg0, %c0_i32, %arg1, %c0_i32_0 : i32, i32, i32, i32
  }
  func.func @transform_4(%arg0: i32, %arg1: i32, %arg2: i32) -> (i32, i32, i32, i32) {
    %c0_i32 = arith.constant 0 : i32
    %c0_i32_0 = arith.constant 0 : i32
    %c0_i32_1 = arith.constant 0 : i32
    return %arg0, %c0_i32, %arg1, %c0_i32_0 : i32, i32, i32, i32
  }
  func.func @transform_5(%arg0: i32, %arg1: i32, %arg2: i32) -> (i32, i32, i32, i32) {
    %c0_i32 = arith.constant 0 : i32
    %c0_i32_0 = arith.constant 0 : i32
    %c0_i32_1 = arith.constant 0 : i32
    return %arg0, %c0_i32, %arg1, %c0_i32_0 : i32, i32, i32, i32
  }
}

</mosaic_0001>

<llo_original>
// kernel: tpu_custom_call.1
$region0: #{tpu_custom_call.1}
  #allocation0 [shape = 'u32[]', space=smem, size = 0x4, offset = 0x4, fixed_abs, tag = 'smem constant byte address 0x4 - core index']
  #allocation1 [shape = 'u32[144,128]{1,0:T(1,128)}', space=vmem, size = 0x12000, scoped, tag = 'internal scratch']
  #allocation2 [shape = 'f32[8,96]{1,0:T(8,128)}', space=vmem, size = 0x1000, scoped, tag = 'scratch operand']
  %s0 = inlined_call_operand.hbm [shape: bf16[2,8,16], index: 0, kind: input, shape index: {}]
  %s1 = inlined_call_operand.hbm [shape: bf16[16,96], index: 1, kind: input, shape index: {}]
  %s2 = inlined_call_operand.vmem [shape: f32[1,96], index: 2, kind: input, shape index: {}]
  %s3 = inlined_call_operand.hbm [shape: bf16[2,4,8,8], index: 3, kind: output, shape index: {0}]
  %s4 = inlined_call_operand.hbm [shape: bf16[2,4,8,8], index: 4, kind: output, shape index: {1}]
  %s5 = inlined_call_operand.hbm [shape: bf16[2,4,8,8], index: 5, kind: output, shape index: {2}]
  %6 = xla_tuple %s3, %s4, %s5
  %s7 = sld [smem:[#allocation0]]
  $region77: #{tpu_custom_call.1} parent=0
    _
  %s9 = ssub.s32 1, %s7
  %s10 = scalar_select 0, %s9, %s7
  $region1: #{tpu_custom_call.1} parent=0
    #allocation3 [shape = 'u8[4096]{0}', space=vmem, size = 0x1000, scoped, tag = 'input window, operand 0']
    #allocation4 [shape = 's32[2]{0}', space=sflag, size = 0x8, scoped, tag = 'scoped memory for tpu_custom_call.1']
    #allocation5 [shape = 's32[2]{0}', space=sflag, size = 0x8, scoped, tag = 'scoped memory for tpu_custom_call.1']
    #allocation6 [shape = 'u8[4096]{0}', space=vmem, size = 0x1000, scoped, tag = 'input window, operand 1, single buffered']
    #allocation7 [shape = 's32[1]{0}', space=sflag, size = 0x4, scoped, tag = 'scoped memory for tpu_custom_call.1']
    #allocation8 [shape = 'u8[16384]{0}', space=vmem, size = 0x4000, scoped, tag = 'output window, operand 0']
    #allocation9 [shape = 'u8[16384]{0}', space=vmem, size = 0x4000, scoped, tag = 'output window, operand 1']
    #allocation10 [shape = 's32[2]{0}', space=sflag, size = 0x8, scoped, tag = 'scoped memory for tpu_custom_call.1']
    #allocation11 [shape = 'u8[16384]{0}', space=vmem, size = 0x4000, scoped, tag = 'output window, operand 2']
    %11 = vsyncpa [#allocation4], 0
    %s12 = scalar_lea.sflag [#allocation4], 1
    %13 = vsyncpa %s12, 0
    %14 = vsyncpa [#allocation7], 0
    %15 = vsyncpa [#allocation5], 0
    %s16 = scalar_lea.sflag [#allocation5], 1
    %17 = vsyncpa %s16, 0
    %18 = vsyncpa [#allocation10], 0
    %s19 = scalar_lea.sflag [#allocation10], 1
    %20 = vsyncpa %s19, 0
    loop: start=0, step=1, limit=4
    $region2: #{tpu_custom_call.1} parent=1 // loop_pre_header
      _
    $region3: #{tpu_custom_call.1} parent=1 // loop_header
      %s22 = sphi 0, %s26
      %p23 = scmp.ge.s32.totalorder %s22, 4
      %s29 = sphi 0, %s48
      %s30 = sphi 0, %s44
      %s31 = sphi 0, %s40
      %s32 = sphi 0, %s29
      %s33 = sphi 0, %s30
      %s34 = sphi 0, %s31
      %s35 = sphi 0, %s32
      %s36 = sphi 0, %s33
      %s37 = sphi 0, %s34
      %s55 = sphi 0, %s57
      %s58 = sphi 0, %s55
      %s59 = sphi 0, %s58
      %s75 = sphi 0, %s59
      %s81 = sphi 0, %s83
      %s84 = sphi 0, %s81
      %s85 = sphi 0, %s84
      %s101 = sphi 0, %s85
      %s105 = sphi 0, %s105
      %s107 = sphi 0, %s105
      %s108 = sphi 0, %s107
      %s122 = sphi 0, %s108
      %s130 = sphi 0, %s132
      %s133 = sphi 0, %s130
      %s134 = sphi 0, %s133
      %s150 = sphi 0, %s134
      %s158 = sphi 0, %s160
      %s161 = sphi 0, %s158
      %s162 = sphi 0, %s161
      %s178 = sphi 0, %s162
      %s186 = sphi 0, %s188
      %s189 = sphi 0, %s186
      %s190 = sphi 0, %s189
      %s206 = sphi 0, %s190
    $region4: #{tpu_custom_call.1} parent=1 // loop_header_branch
      %25 = sbr.rel (%p23) target = $region8
    $region5: #{tpu_custom_call.1} parent=1 // loop_body
      %s27 = ssub.s32 %s22, 1
      %s28 = ssub.s32 %s22, 2
      %s38 = sadd.s32 1, %s31
      %p39 = scmp.ge.s32.totalorder %s38, 1
      %s40 = scalar_select %p39, 0, %s38
      %s41 = sadd.s32 1, %s30
      %s42 = scalar_select %p39, %s41, %s30
      %p43 = scmp.ge.s32.totalorder %s42, 1
      %s44 = scalar_select %p43, 0, %s42
      %s45 = sadd.s32 1, %s29
      %s46 = scalar_select %p43, %s45, %s29
      %p47 = scmp.ge.s32.totalorder %s46, 2
      %s48 = scalar_select %p47, 0, %s46
      %s49 = ssub.s32 %s29, %s48
      %s50 = ssub.s32 %s30, %s44
      %s51 = sor.u32 %s49, %s50
      %s52 = ssub.s32 %s31, %s40
      %s53 = sor.u32 %s51, %s52
      %p54 = scmp.eq.s32.totalorder %s53, 0
      %s56 = sadd.s32 %s55, 1
      %s57 = scalar_select %p54, %s55, %s56
      %p60 = pneg %p54
      %p61 = scmp.eq.s32.totalorder %s22, 1
      %p62 = por %p60, %p61
      %p63 = scmp.ne.s32.totalorder %s55, %s58
      %p64 = scmp.eq.s32.totalorder %s22, 0
      %p65 = por %p63, %p64
      %p66 = scmp.ne.s32.totalorder %s55, %s58
      %p67 = scmp.eq.s32.totalorder %s27, 1
      %p68 = por %p66, %p67
      %p69 = scmp.ne.s32.totalorder %s58, %s59
      %p70 = scmp.eq.s32.totalorder %s27, 0
      %p71 = por %p69, %p70
      %p72 = scmp.ne.s32.totalorder %s58, %s59
      %p73 = scmp.eq.s32.totalorder %s28, 1
      %p74 = por %p72, %p73
      %p76 = scmp.ne.s32.totalorder %s59, %s75
      %p77 = scmp.eq.s32.totalorder %s28, 0
      %p78 = por %p76, %p77
      %s79 = ssub.s32 %s31, %s40
      %p80 = scmp.eq.s32.totalorder %s79, 0
      %s82 = sadd.s32 %s81, 1
      %s83 = scalar_select %p80, %s81, %s82
      %p86 = pneg %p80
      %p87 = scmp.eq.s32.totalorder %s22, 1
      %p88 = por %p86, %p87
      %p89 = scmp.ne.s32.totalorder %s81, %s84
      %p90 = scmp.eq.s32.totalorder %s22, 0
      %p91 = por %p89, %p90
      %p92 = scmp.ne.s32.totalorder %s81, %s84
      %p93 = scmp.eq.s32.totalorder %s27, 1
      %p94 = por %p92, %p93
      %p95 = scmp.ne.s32.totalorder %s84, %s85
      %p96 = scmp.eq.s32.totalorder %s27, 0
      %p97 = por %p95, %p96
      %p98 = scmp.ne.s32.totalorder %s84, %s85
      %p99 = scmp.eq.s32.totalorder %s28, 1
      %p100 = por %p98, %p99
      %p102 = scmp.ne.s32.totalorder %s85, %s101
      %p103 = scmp.eq.s32.totalorder %s28, 0
      %p104 = por %p102, %p103
      %s106 = sadd.s32 %s105, 1
      %p109 = scmp.eq.s32.totalorder %s22, 1
      %p110 = scmp.ne.s32.totalorder %s105, %s107
      %p111 = scmp.eq.s32.totalorder %s22, 0
      %p112 = por %p110, %p111
      %p113 = scmp.ne.s32.totalorder %s105, %s107
      %p114 = scmp.eq.s32.totalorder %s27, 1
      %p115 = por %p113, %p114
      %p116 = scmp.ne.s32.totalorder %s107, %s108
      %p117 = scmp.eq.s32.totalorder %s27, 0
      %p118 = por %p116, %p117
      %p119 = scmp.ne.s32.totalorder %s107, %s108
      %p120 = scmp.eq.s32.totalorder %s28, 1
      %p121 = por %p119, %p120
      %p123 = scmp.ne.s32.totalorder %s108, %s122
      %p124 = scmp.eq.s32.totalorder %s28, 0
      %p125 = por %p123, %p124
      %s126 = ssub.s32 %s29, %s48
      %s127 = ssub.s32 %s30, %s44
      %s128 = sor.u32 %s126, %s127
      %p129 = scmp.eq.s32.totalorder %s128, 0
      %s131 = sadd.s32 %s130, 1
      %s132 = scalar_select %p129, %s130, %s131
      %p135 = pneg %p129
      %p136 = scmp.eq.s32.totalorder %s22, 1
      %p137 = por %p135, %p136
      %p138 = scmp.ne.s32.totalorder %s130, %s133
      %p139 = scmp.eq.s32.totalorder %s22, 0
      %p140 = por %p138, %p139
      %p141 = scmp.ne.s32.totalorder %s130, %s133
      %p142 = scmp.eq.s32.totalorder %s27, 1
      %p143 = por %p141, %p142
      %p144 = scmp.ne.s32.totalorder %s133, %s134
      %p145 = scmp.eq.s32.totalorder %s27, 0
      %p146 = por %p144, %p145
      %p147 = scmp.ne.s32.totalorder %s133, %s134
      %p148 = scmp.eq.s32.totalorder %s28, 1
      %p149 = por %p147, %p148
      %p151 = scmp.ne.s32.totalorder %s134, %s150
      %p152 = scmp.eq.s32.totalorder %s28, 0
      %p153 = por %p151, %p152
      %s154 = ssub.s32 %s29, %s48
      %s155 = ssub.s32 %s30, %s44
      %s156 = sor.u32 %s154, %s155
      %p157 = scmp.eq.s32.totalorder %s156, 0
      %s159 = sadd.s32 %s158, 1
      %s160 = scalar_select %p157, %s158, %s159
      %p163 = pneg %p157
      %p164 = scmp.eq.s32.totalorder %s22, 1
      %p165 = por %p163, %p164
      %p166 = scmp.ne.s32.totalorder %s158, %s161
      %p167 = scmp.eq.s32.totalorder %s22, 0
      %p168 = por %p166, %p167
      %p169 = scmp.ne.s32.totalorder %s158, %s161
      %p170 = scmp.eq.s32.totalorder %s27, 1
      %p171 = por %p169, %p170
      %p172 = scmp.ne.s32.totalorder %s161, %s162
      %p173 = scmp.eq.s32.totalorder %s27, 0
      %p174 = por %p172, %p173
      %p175 = scmp.ne.s32.totalorder %s161, %s162
      %p176 = scmp.eq.s32.totalorder %s28, 1
      %p177 = por %p175, %p176
      %p179 = scmp.ne.s32.totalorder %s162, %s178
      %p180 = scmp.eq.s32.totalorder %s28, 0
      %p181 = por %p179, %p180
      %s182 = ssub.s32 %s29, %s48
      %s183 = ssub.s32 %s30, %s44
      %s184 = sor.u32 %s182, %s183
      %p185 = scmp.eq.s32.totalorder %s184, 0
      %s187 = sadd.s32 %s186, 1
      %s188 = scalar_select %p185, %s186, %s187
      %p191 = pneg %p185
      %p192 = scmp.eq.s32.totalorder %s22, 1
      %p193 = por %p191, %p192
      %p194 = scmp.ne.s32.totalorder %s186, %s189
      %p195 = scmp.eq.s32.totalorder %s22, 0
      %p196 = por %p194, %p195
      %p197 = scmp.ne.s32.totalorder %s186, %s189
      %p198 = scmp.eq.s32.totalorder %s27, 1
      %p199 = por %p197, %p198
      %p200 = scmp.ne.s32.totalorder %s189, %s190
      %p201 = scmp.eq.s32.totalorder %s27, 0
      %p202 = por %p200, %p201
      %p203 = scmp.ne.s32.totalorder %s189, %s190
      %p204 = scmp.eq.s32.totalorder %s28, 1
      %p205 = por %p203, %p204
      %p207 = scmp.ne.s32.totalorder %s190, %s206
      %p208 = scmp.eq.s32.totalorder %s28, 0
      %p209 = por %p207, %p208
      %p210 = scmp.le.s32.totalorder 1, %s22
      %p211 = scmp.lt.s32.totalorder %s22, 3
      %p212 = pnand %p210, %p211
      %p213 = pneg %p212
      // Predicated region
      $region9: #{tpu_custom_call.1} parent=5 // pred_check
        _
      $region10: #{tpu_custom_call.1} parent=5 // pred_check_branch
        %215 = sbr.rel (%p212) target = $region12
      $region11: #{tpu_custom_call.1} parent=5 // pred_region
        %s216 = ssub.s32 %s22, 1
        // Predicated region
        $region13: #{tpu_custom_call.1} parent=11 // pred_check
          %p217 = pneg %p97
        $region14: #{tpu_custom_call.1} parent=11 // pred_check_branch
          %219 = sbr.rel (%p217) target = $region16
        $region15: #{tpu_custom_call.1} parent=11 // pred_region
          %s220 = smul.u32 2, %s34
          %s222 = ssub.s32 128, 128
          %223 = vsyncadd [#allocation7], %s222
          %s224 = smul.addr %s220, 64
          %s225 = scalar_lea.hbm %s1, %s224
          %s226 = sshll.u32 [#allocation6], 4
          %s227 = int_to_ptr.vmem [resolvable:$true] %s226
          %232 = dma.hbm_to_vmem [thread:$0]  %s225, 128, %s227, [#allocation7], 64, 64, 4
        $region16: #{tpu_custom_call.1} parent=11 // pred_fallthru
          _
        // Predicated region
        $region17: #{tpu_custom_call.1} parent=11 // pred_check
          %p233 = pneg %p118
        $region18: #{tpu_custom_call.1} parent=11 // pred_check_branch
          %235 = sbr.rel (%p233) target = $region20
        $region19: #{tpu_custom_call.1} parent=11 // pred_region
          _
        $region20: #{tpu_custom_call.1} parent=11 // pred_fallthru
          _
      $region12: #{tpu_custom_call.1} parent=5 // pred_fallthru
        _
      %p236 = scmp.lt.s32.totalorder %s22, 2
      // Predicated region
      $region21: #{tpu_custom_call.1} parent=5 // pred_check
        %p237 = pneg %p236
      $region22: #{tpu_custom_call.1} parent=5 // pred_check_branch
        %239 = sbr.rel (%p237) target = $region24
      $region23: #{tpu_custom_call.1} parent=5 // pred_region
        // Predicated region
        $region25: #{tpu_custom_call.1} parent=23 // pred_check
          %p240 = pneg %p65
        $region26: #{tpu_custom_call.1} parent=23 // pred_check_branch
          %242 = sbr.rel (%p240) target = $region28
        $region27: #{tpu_custom_call.1} parent=23 // pred_region
          %s243 = sand.u32 %s55, 1
          %s244 = scalar_lea.sflag [#allocation4], %s243
          %s245 = sand.u32 %s55, 1
          %s246 = smul.addr %s245, 4
          %s247 = scalar_lea.vmem [#allocation3], %s246
          %s249 = ssub.s32 64, 64
          %250 = vsyncadd %s244, %s249
          %s251 = sadd.s32 %s31, %s30
          %s252 = sadd.s32 %s251, %s29
          %s253 = smul.addr %s252, 64
          %s254 = scalar_lea.hbm %s0, %s253
          %s256 = sshll.u32 %s247, 4
          %s257 = int_to_ptr.vmem [resolvable:$true] %s256
          %259 = dma.hbm_to_vmem [thread:$0]  %s254, 64, %s257, %s244
        $region28: #{tpu_custom_call.1} parent=23 // pred_fallthru
          _
      $region24: #{tpu_custom_call.1} parent=5 // pred_fallthru
        _
      %p260 = scmp.le.s32.totalorder 1, %s22
      %p261 = scmp.lt.s32.totalorder %s22, 3
      %p262 = pnand %p260, %p261
      %p263 = pneg %p262
      // Predicated region
      $region29: #{tpu_custom_call.1} parent=5 // pred_check
        _
      $region30: #{tpu_custom_call.1} parent=5 // pred_check_branch
        %265 = sbr.rel (%p262) target = $region32
      $region31: #{tpu_custom_call.1} parent=5 // pred_region
        %s266 = ssub.s32 %s22, 1
        %s267 = sand.u32 %s58, 1
        %s268 = scalar_lea.sflag [#allocation4], %s267
        %s269 = sand.u32 %s58, 1
        %s270 = smul.addr %s269, 4
        %s271 = scalar_lea.vmem [#allocation3], %s270
        // Predicated region
        $region33: #{tpu_custom_call.1} parent=31 // pred_check
          %p272 = pneg %p71
        $region34: #{tpu_custom_call.1} parent=31 // pred_check_branch
          %274 = sbr.rel (%p272) target = $region36
        $region35: #{tpu_custom_call.1} parent=31 // pred_region
          %275 = dma.done %s268, 64
        $region36: #{tpu_custom_call.1} parent=31 // pred_fallthru
          _
        // Predicated region
        $region37: #{tpu_custom_call.1} parent=31 // pred_check
          %p276 = pneg %p97
        $region38: #{tpu_custom_call.1} parent=31 // pred_check_branch
          %278 = sbr.rel (%p276) target = $region40
        $region39: #{tpu_custom_call.1} parent=31 // pred_region
          %279 = dma.done [#allocation7], 128
        $region40: #{tpu_custom_call.1} parent=31 // pred_fallthru
          _
        %s280 = sand.u32 %s58, 1
        %s281 = scalar_lea.sflag [#allocation4], %s280
        %s282 = sand.u32 %s58, 1
        %s283 = smul.addr %s282, 4
        %s284 = scalar_lea.vmem [#allocation3], %s283
        %p285 = pneg %p71
        %p286 = pneg %p68
        %p287 = pneg %p97
        %p288 = pneg %p94
        %p289 = pneg %p118
        %p290 = pneg %p115
        %p291 = pneg %p146
        %p292 = pneg %p143
        %s293 = sand.u32 %s133, 1
        %s294 = scalar_lea.sflag [#allocation5], %s293
        %s295 = sand.u32 %s133, 1
        %s296 = smul.addr %s295, 16
        %s297 = scalar_lea.vmem [#allocation8], %s296
        %p298 = pneg %p174
        %p299 = pneg %p171
        %s300 = sand.u32 %s27, 1
        %s301 = scalar_lea.sflag [#allocation10], %s300
        %s302 = sand.u32 %s161, 1
        %s303 = smul.addr %s302, 16
        %s304 = scalar_lea.vmem [#allocation9], %s303
        %p305 = pneg %p202
        %p306 = pneg %p199
        %s307 = sand.u32 %s27, 1
        %s308 = scalar_lea.sflag [#allocation10], %s307
        %s309 = sand.u32 %s189, 1
        %s310 = smul.addr %s309, 16
        %s311 = scalar_lea.vmem [#allocation11], %s310
        %s312 = smul.u32 2, %s34
        %p314 = scmp.eq.s32.totalorder %s34, 0
        // Predicated region
        $region41: #{tpu_custom_call.1} parent=31 // pred_check
          %p315 = pneg %p314
        $region42: #{tpu_custom_call.1} parent=31 // pred_check_branch
          %317 = sbr.rel (%p315) target = $region44
        $region43: #{tpu_custom_call.1} parent=31 // pred_region
          %vm318 = vcmask 785408
          %319 = vst.msk [vmem:[#allocation2] sm:$0xff] %vm318, 0.0
        $region44: #{tpu_custom_call.1} parent=31 // pred_fallthru
          _
        %v320 = vld [vmem:[#allocation2] sm:$0xff]
        %v321 = vld [vmem:[%s271] sm:$0xf]
        %v322 = vld [vmem:[#allocation6] sm:$0xf]
        %v323 = vld [vmem:[#allocation6 + $0x4] sm:$0xf]
        %v326 = vunpack.c.l.b16 %v322
        %v327 = vunpack.c.l.b16 %v323
        %v328 = vpack.c.b16 %v327, %v326
        %vm330 = vcmask 130048
        %v332 = vsel %vm330, %v321, 0
        %334 = vmatprep.subr.bf16.mxu0 0
        %335 = vmatpush1.bf16.msra.mxu0 %v328
        %336 = vmatprep.subr.bf16.mxu0 0
        %337 = vmatpush1.bf16.msra.mxu0 0
        %338 = vmatprep.subr.bf16.mxu0 0
        %339 = vmatpush1.bf16.msra.mxu0 0
        %340 = vmatprep.subr.bf16.mxu0 0
        %341 = vmatpush1.bf16.msra.mxu0 0
        %342 = vmatprep.subr.bf16.mxu0 0
        %343 = vmatpush1.bf16.msra.mxu0 0
        %344 = vmatprep.subr.bf16.mxu0 0
        %345 = vmatpush1.bf16.msra.mxu0 0
        %346 = vmatprep.subr.bf16.mxu0 0
        %347 = vmatpush1.bf16.msra.mxu0 0
        %348 = vmatprep.subr.bf16.mxu0 0
        %349 = vmatpush1.bf16.msra.mxu0 0
        %350 = vmatprep.subr.bf16.mxu0 0
        %351 = vmatpush1.bf16.msra.mxu0 0
        %352 = vmatprep.subr.bf16.mxu0 0
        %353 = vmatpush1.bf16.msra.mxu0 0
        %354 = vmatprep.subr.bf16.mxu0 0
        %355 = vmatpush1.bf16.msra.mxu0 0
        %356 = vmatprep.subr.bf16.mxu0 0
        %357 = vmatpush1.bf16.msra.mxu0 0
        %358 = vmatprep.subr.bf16.mxu0 0
        %359 = vmatpush1.bf16.msra.mxu0 0
        %360 = vmatprep.subr.bf16.mxu0 0
        %361 = vmatpush1.bf16.msra.mxu0 0
        %362 = vmatprep.subr.bf16.mxu0 0
        %363 = vmatpush1.bf16.msra.mxu0 0
        %364 = vmatprep.subr.bf16.mxu0 0
        %365 = vmatpush1.bf16.msra.mxu0 0
        %366 = vmatprep.mubr.bf16.mxu0 0
        %367 = vmatmul.mubr.bf16.gmra.mrb[0].mxu0 %v332
        %v368 = vpop.f32.mrb[0].mxu0
        %v369 = vadd.f32 0.0, %v368
        %v370 = vpop.f32.mrb[0].mxu0
        %v371 = vpop.f32.mrb[0].mxu0
        %v372 = vpop.f32.mrb[0].mxu0
        %373 = vdwg.mxu0
        %v374 = vadd.f32 %v320, %v369
        %vm375 = vcmask 785408
        %376 = vst.msk [vmem:[#allocation2] sm:$0xff] %vm375, %v374
        // Predicated region
        $region45: #{tpu_custom_call.1} parent=31 // pred_check
          %p377 = pneg %p314
        $region46: #{tpu_custom_call.1} parent=31 // pred_check_branch
          %379 = sbr.rel (%p377) target = $region48
        $region47: #{tpu_custom_call.1} parent=31 // pred_region
          %v380 = vld [vmem:[#allocation2] sm:$0xff]
          %v381 = vld [vmem:[%s2] sm:$0x1]
          %v383 = vlaneseq
          %v384 = vshrl.u32 %v383, 7
          %v385 = vsub.s32 0, %v384
          %v386 = vrot.slane %v381, %v385
          %v388 = vadd.f32 %v380, %v386
          %v389 = vpack.c.bf16 %v388, %v388
          %vm390 = vcmask 60416
          %391 = vst.msk [vmem:[%s297] sm:$0xf] %vm390, %v389
          %v393 = vunpack.c.l.b16 %v389
          %v394 = vpack.c.b16 %v393, %v393
          %395 = vrot.lane.b32.xlu0 %v394, 96
          %v396 = vpop.permute.xlu0 %395
          %398 = vst.msk [vmem:[%s304] sm:$0xf] %vm390, %v396
          %399 = vrot.lane.b32.xlu0 %v394, 64
          %v400 = vpop.permute.xlu0 %399
          %402 = vst.msk [vmem:[%s311] sm:$0xf] %vm390, %v400
          %403 = vrot.lane.b32.xlu0 %v394, 120
          %v404 = vpop.permute.xlu0 %403
          %s406 = scalar_lea.vmem %s297, 4 [#allocation8]
          %407 = vst.msk [vmem:[%s406] sm:$0xf] %vm390, %v404
          %408 = vrot.lane.b32.xlu0 %v394, 88
          %v409 = vpop.permute.xlu0 %408
          %s411 = scalar_lea.vmem %s304, 4 [#allocation9]
          %412 = vst.msk [vmem:[%s411] sm:$0xf] %vm390, %v409
          %413 = vrot.lane.b32.xlu0 %v394, 56
          %v414 = vpop.permute.xlu0 %413
          %s416 = scalar_lea.vmem %s311, 4 [#allocation11]
          %417 = vst.msk [vmem:[%s416] sm:$0xf] %vm390, %v414
          %418 = vrot.lane.b32.xlu0 %v394, 112
          %v419 = vpop.permute.xlu0 %418
          %s421 = scalar_lea.vmem %s297, 8 [#allocation8]
          %422 = vst.msk [vmem:[%s421] sm:$0xf] %vm390, %v419
          %423 = vrot.lane.b32.xlu0 %v394, 80
          %v424 = vpop.permute.xlu0 %423
          %s426 = scalar_lea.vmem %s304, 8 [#allocation9]
          %427 = vst.msk [vmem:[%s426] sm:$0xf] %vm390, %v424
          %428 = vrot.lane.b32.xlu0 %v394, 48
          %v429 = vpop.permute.xlu0 %428
          %s431 = scalar_lea.vmem %s311, 8 [#allocation11]
          %432 = vst.msk [vmem:[%s431] sm:$0xf] %vm390, %v429
          %433 = vrot.lane.b32.xlu0 %v394, 104
          %v434 = vpop.permute.xlu0 %433
          %s436 = scalar_lea.vmem %s297, 12 [#allocation8]
          %437 = vst.msk [vmem:[%s436] sm:$0xf] %vm390, %v434
          %438 = vrot.lane.b32.xlu0 %v394, 72
          %v439 = vpop.permute.xlu0 %438
          %s441 = scalar_lea.vmem %s304, 12 [#allocation9]
          %442 = vst.msk [vmem:[%s441] sm:$0xf] %vm390, %v439
          %443 = vrot.lane.b32.xlu0 %v394, 40
          %v444 = vpop.permute.xlu0 %443
          %s446 = scalar_lea.vmem %s311, 12 [#allocation11]
          %447 = vst.msk [vmem:[%s446] sm:$0xf] %vm390, %v444
        $region48: #{tpu_custom_call.1} parent=31 // pred_fallthru
          _
        %s448 = sand.u32 %s133, 1
        %s449 = scalar_lea.sflag [#allocation5], %s448
        %s450 = sand.u32 %s133, 1
        %s451 = smul.addr %s450, 16
        %s452 = scalar_lea.vmem [#allocation8], %s451
        %s453 = sand.u32 %s27, 1
        %s454 = scalar_lea.sflag [#allocation10], %s453
        %s455 = sand.u32 %s161, 1
        %s456 = smul.addr %s455, 16
        %s457 = scalar_lea.vmem [#allocation9], %s456
        %s458 = sand.u32 %s27, 1
        %s459 = scalar_lea.sflag [#allocation10], %s458
        %s460 = sand.u32 %s189, 1
        %s461 = smul.addr %s460, 16
        %s462 = scalar_lea.vmem [#allocation11], %s461
        // Predicated region
        $region49: #{tpu_custom_call.1} parent=31 // pred_check
          %p463 = pneg %p143
        $region50: #{tpu_custom_call.1} parent=31 // pred_check_branch
          %465 = sbr.rel (%p463) target = $region52
        $region51: #{tpu_custom_call.1} parent=31 // pred_region
          %s467 = ssub.s32 256, 256
          %468 = vsyncadd %s449, %s467
          %s469 = smul.addr %s32, 4
          %s470 = sadd.s32 %s33, %s469
          %s471 = smul.addr %s470, 64
          %s472 = scalar_lea.hbm %s3, %s471
          %s473 = sshll.u32 %s452, 4
          %s474 = int_to_ptr.vmem [resolvable:$true] %s473
          %479 = dma.vmem_to_hbm [thread:$0]  %s474, 256, %s472, %s449, 64, 64, 4
        $region52: #{tpu_custom_call.1} parent=31 // pred_fallthru
          _
        // Predicated region
        $region53: #{tpu_custom_call.1} parent=31 // pred_check
          %p480 = pneg %p171
        $region54: #{tpu_custom_call.1} parent=31 // pred_check_branch
          %482 = sbr.rel (%p480) target = $region56
        $region55: #{tpu_custom_call.1} parent=31 // pred_region
          %s484 = ssub.s32 256, 256
          %485 = vsyncadd %s454, %s484
          %s486 = smul.addr %s32, 4
          %s487 = sadd.s32 %s33, %s486
          %s488 = smul.addr %s487, 64
          %s489 = scalar_lea.hbm %s4, %s488
          %s490 = sshll.u32 %s457, 4
          %s491 = int_to_ptr.vmem [resolvable:$true] %s490
          %496 = dma.vmem_to_hbm [thread:$0]  %s491, 256, %s489, %s454, 64, 64, 4
        $region56: #{tpu_custom_call.1} parent=31 // pred_fallthru
          _
        // Predicated region
        $region57: #{tpu_custom_call.1} parent=31 // pred_check
          %p497 = pneg %p199
        $region58: #{tpu_custom_call.1} parent=31 // pred_check_branch
          %499 = sbr.rel (%p497) target = $region60
        $region59: #{tpu_custom_call.1} parent=31 // pred_region
          %s501 = ssub.s32 256, 256
          %502 = vsyncadd %s459, %s501
          %s503 = smul.addr %s32, 4
          %s504 = sadd.s32 %s33, %s503
          %s505 = smul.addr %s504, 64
          %s506 = scalar_lea.hbm %s5, %s505
          %s507 = sshll.u32 %s462, 4
          %s508 = int_to_ptr.vmem [resolvable:$true] %s507
          %513 = dma.vmem_to_hbm [thread:$0]  %s508, 256, %s506, %s459, 64, 64, 4
        $region60: #{tpu_custom_call.1} parent=31 // pred_fallthru
          _
      $region32: #{tpu_custom_call.1} parent=5 // pred_fallthru
        _
      %p514 = scmp.le.s32.totalorder 2, %s22
      // Predicated region
      $region61: #{tpu_custom_call.1} parent=5 // pred_check
        %p515 = pneg %p514
      $region62: #{tpu_custom_call.1} parent=5 // pred_check_branch
        %517 = sbr.rel (%p515) target = $region64
      $region63: #{tpu_custom_call.1} parent=5 // pred_region
        %s518 = ssub.s32 %s22, 2
        // Predicated region
        $region65: #{tpu_custom_call.1} parent=63 // pred_check
          %p519 = pneg %p149
        $region66: #{tpu_custom_call.1} parent=63 // pred_check_branch
          %521 = sbr.rel (%p519) target = $region68
        $region67: #{tpu_custom_call.1} parent=63 // pred_region
          %s522 = sand.u32 %s134, 1
          %s523 = scalar_lea.sflag [#allocation5], %s522
          %s524 = sand.u32 %s134, 1
          %s525 = smul.addr %s524, 16
          %s526 = scalar_lea.vmem [#allocation8], %s525
          %527 = dma.done %s523, 256
        $region68: #{tpu_custom_call.1} parent=63 // pred_fallthru
          _
        // Predicated region
        $region69: #{tpu_custom_call.1} parent=63 // pred_check
          %p528 = pneg %p177
        $region70: #{tpu_custom_call.1} parent=63 // pred_check_branch
          %530 = sbr.rel (%p528) target = $region72
        $region71: #{tpu_custom_call.1} parent=63 // pred_region
          %s531 = sand.u32 %s28, 1
          %s532 = scalar_lea.sflag [#allocation10], %s531
          %s533 = sand.u32 %s162, 1
          %s534 = smul.addr %s533, 16
          %s535 = scalar_lea.vmem [#allocation9], %s534
          %536 = dma.done %s532, 256
        $region72: #{tpu_custom_call.1} parent=63 // pred_fallthru
          _
        // Predicated region
        $region73: #{tpu_custom_call.1} parent=63 // pred_check
          %p537 = pneg %p205
        $region74: #{tpu_custom_call.1} parent=63 // pred_check_branch
          %539 = sbr.rel (%p537) target = $region76
        $region75: #{tpu_custom_call.1} parent=63 // pred_region
          %s540 = sand.u32 %s28, 1
          %s541 = scalar_lea.sflag [#allocation10], %s540
          %s542 = sand.u32 %s190, 1
          %s543 = smul.addr %s542, 16
          %s544 = scalar_lea.vmem [#allocation11], %s543
          %545 = dma.done %s541, 256
        $region76: #{tpu_custom_call.1} parent=63 // pred_fallthru
          _
      $region64: #{tpu_custom_call.1} parent=5 // pred_fallthru
        _
    $region6: #{tpu_custom_call.1} parent=1 // loop_footer
      %s26 = sadd.s32 1, %s22
    $region7: #{tpu_custom_call.1} parent=1 // loop_footer_branch
      %21 = sbr.rel target = $region3
    $region8: #{tpu_custom_call.1} parent=1 // loop_exit
      _
    %546 = vsyncpa [#allocation4], 1
    %s547 = scalar_lea.sflag [#allocation4], 1
    %548 = vsyncpa %s547, 1
    %549 = vsyncpa [#allocation7], 1
    %550 = vsyncpa [#allocation5], 1
    %s551 = scalar_lea.sflag [#allocation5], 1
    %552 = vsyncpa %s551, 1
    %553 = vsyncpa [#allocation10], 1
    %s554 = scalar_lea.sflag [#allocation10], 1
    %555 = vsyncpa %s554, 1

</llo_original>
